<compile_context>
chip_gen: v5e
topology: v5e:2x2
jax: 0.10.0
libtpu: 0.0.40
codegen_flags: <defaults>
</compile_context>

<pallas_src>
import functools

import jax
import jax.numpy as jnp
from jax.experimental import pallas as pl
from jax.experimental.pallas import tpu as pltpu


def _round_up(x, m):
    return ((x + m - 1) // m) * m


def _largest_divisor_leq(n, cap):
    cap = max(1, min(n, cap))
    for d in range(cap, 0, -1):
        if n % d == 0:
            return d
    return 1


def _feature_tile(total, unit, cap):
    """Largest multiple of `unit` that divides `total` and is <= max(cap, unit)."""
    cap = max(unit, cap)
    best = unit
    t = unit
    while t <= min(total, cap):
        if total % t == 0:
            best = t
        t += unit
    return best


def _vmem_capacity_bytes():
    # Physical per-TensorCore VMEM: 128 MiB on v5e/v6e, 64 MiB on v7x.
    try:
        cap = getattr(pltpu.get_tpu_info(), "vmem_capacity_bytes", None)
        if cap:
            return int(cap)
    except Exception:
        pass
    return 64 * 1024 * 1024  # conservative fallback (v7x)


# ---------------------------------------------------------------------------
# Fused small-graph kernel: both matmuls + bias in one VMEM-resident step.
# ---------------------------------------------------------------------------
def fused_gcn_kernel(a_ref, x_ref, w_ref, b_ref, o_ref, *, agg_first):
    # a: (BB, Np, Np)  x: (BB, Np, Din)  w: (Din, Dout)  b: (1, Dout)
    a = a_ref[...]
    x = x_ref[...]
    w = w_ref[...]
    bb, np_, din = x.shape
    dout = w.shape[1]
    if agg_first:
        # (A @ X) @ W^T : aggregation runs over the narrower input features.
        y = jnp.einsum("bnm,bmd->bnd", a, x, preferred_element_type=jnp.float32)
        y2 = y.astype(x.dtype).reshape(bb * np_, din)
        acc = jnp.dot(y2, w, preferred_element_type=jnp.float32)
        acc = acc.reshape(bb, np_, dout)
    else:
        # A @ (X @ W^T) : aggregation runs over the narrower output features.
        h = jnp.dot(x.reshape(bb * np_, din), w, preferred_element_type=jnp.float32)
        h = h.astype(x.dtype).reshape(bb, np_, dout)
        acc = jnp.einsum("bnm,bmf->bnf", a, h, preferred_element_type=jnp.float32)
    o_ref[...] = (acc + b_ref[...]).astype(o_ref.dtype)


# ---------------------------------------------------------------------------
# Large-graph fallback kernels (two phases, intermediate hits HBM once).
# ---------------------------------------------------------------------------
def linear_kernel(x_ref, w_ref, b_ref, o_ref):
    # x: (1, TR, Cin)  w: (Cin, TF)  b: (1, TF)  o: (1, TR, TF)
    acc = jnp.dot(x_ref[0], w_ref[...], preferred_element_type=jnp.float32)
    o_ref[0] = (acc + b_ref[...]).astype(o_ref.dtype)


def aggregate_kernel(a_ref, h_ref, b_ref, o_ref):
    # a: (BB, TM, Np)  h: (BB, Np, TF)  b: (1, TF)  o: (BB, TM, TF)
    acc = jnp.einsum("bnm,bmf->bnf", a_ref[...], h_ref[...],
                     preferred_element_type=jnp.float32)
    o_ref[...] = (acc + b_ref[...]).astype(o_ref.dtype)


def _linear_call(x3, wt, bias2d, out_dtype, vmem_limit):
    B, Np, Cin = x3.shape
    Cout = wt.shape[1]
    itemsize = jnp.dtype(x3.dtype).itemsize
    TR = 256 if Np % 256 == 0 else Np
    # Tile W's output features so the resident W block stays at a few MiB.
    TF = _feature_tile(Cout, 128,
                       max(128, (4 * 1024 * 1024) // max(1, Cin * itemsize)))
    # TODO(synk): a very wide Cin would additionally need a contraction tile
    # over Cin with an f32 accumulator scratch (+ pl.when init/finalize).
    return pl.pallas_call(
        linear_kernel,
        out_shape=jax.ShapeDtypeStruct((B, Np, Cout), out_dtype),
        grid_spec=pltpu.PrefetchScalarGridSpec(
            num_scalar_prefetch=0,
            grid=(B, Np // TR, Cout // TF),
            in_specs=[
                pl.BlockSpec((1, TR, Cin), lambda b, r, f: (b, r, 0)),
                pl.BlockSpec((Cin, TF), lambda b, r, f: (0, f)),
                pl.BlockSpec((1, TF), lambda b, r, f: (0, f)),
            ],
            out_specs=pl.BlockSpec((1, TR, TF), lambda b, r, f: (b, r, f)),
        ),
        compiler_params=pltpu.CompilerParams(
            dimension_semantics=("parallel", "parallel", "parallel"),
            vmem_limit_bytes=vmem_limit,
        ),
    )(x3, wt, bias2d)


def _aggregate_call(a3, h3, bias2d, out_dtype, vmem_budget, vmem_limit):
    B, Np, _ = a3.shape
    C = h3.shape[-1]
    a_item = jnp.dtype(a3.dtype).itemsize
    h_item = jnp.dtype(h3.dtype).itemsize
    o_item = jnp.dtype(out_dtype).itemsize
    TM = 256 if Np % 256 == 0 else Np
    # Feature tile chosen so one graph's double-buffered blocks fit the budget.
    avail = max(1, vmem_budget // 2 - TM * Np * a_item)
    TF = _feature_tile(C, 128, max(128, avail // (Np * h_item + TM * o_item)))
    per_graph = 2 * (TM * Np * a_item + Np * TF * h_item + TM * TF * o_item)
    BB = _largest_divisor_leq(B, max(1, vmem_budget // per_graph))
    if B >= 2 and (B // BB) * (Np // TM) * (C // TF) < 2:
        BB = _largest_divisor_leq(B, B // 2)  # keep both v7x TensorCores busy
    # TODO(synk): very large Np would additionally need a contraction tile over
    # Np with an f32 accumulator scratch (+ pl.when init/finalize).
    return pl.pallas_call(
        aggregate_kernel,
        out_shape=jax.ShapeDtypeStruct((B, Np, C), out_dtype),
        grid_spec=pltpu.PrefetchScalarGridSpec(
            num_scalar_prefetch=0,
            grid=(B // BB, Np // TM, C // TF),
            in_specs=[
                pl.BlockSpec((BB, TM, Np), lambda b, r, f: (b, r, 0)),
                pl.BlockSpec((BB, Np, TF), lambda b, r, f: (b, 0, f)),
                pl.BlockSpec((1, TF), lambda b, r, f: (0, f)),
            ],
            out_specs=pl.BlockSpec((BB, TM, TF), lambda b, r, f: (b, r, f)),
        ),
        compiler_params=pltpu.CompilerParams(
            dimension_semantics=("parallel", "parallel", "parallel"),
            vmem_limit_bytes=vmem_limit,
        ),
    )(a3, h3, bias2d)


def gcn_forward(A, X, W, b, *, compute_dtype=None):
    """A: (B,N,N), X: (B,N,Din), W: (Dout,Din), b: (Dout,) -> (B,N,Dout).

    compute_dtype=jnp.bfloat16 halves HBM traffic and runs the MXU at native
    rate on v6e/v7x (accumulation stays f32).  Default keeps the input dtype
    so results match the f32 PyTorch module within tight tolerance.
    """
    B, N, _ = A.shape
    Din = X.shape[-1]
    Dout = W.shape[0]
    out_dtype = X.dtype
    cdt = jnp.dtype(compute_dtype) if compute_dtype is not None else jnp.dtype(X.dtype)
    itemsize = cdt.itemsize
    out_itemsize = jnp.dtype(out_dtype).itemsize

    # Sublane granularity: f32 packs 8 rows per vreg, bf16 packs 16.
    sub = 16 if itemsize < 4 else 8
    Din_pad = _round_up(Din, 128)     # lane-dense contraction
    Dout_pad = _round_up(Dout, 128)   # lane-dense output (no masked vst)

    # Dynamic matmul order: aggregate over the narrower feature width.
    #   agg_first    : out = (A @ X) @ W^T + b   (PyTorch order, Din < Dout)
    #   linear_first : out = A @ (X @ W^T) + b   (associativity, Dout <= Din)
    agg_first = Dout > Din
    C_mid_pad = Din_pad if agg_first else Dout_pad

    # Generation-aware VMEM budgeting: count every blocked operand twice
    # (Pallas double-buffers inputs AND outputs) and cap at ~1/3 of physical.
    vmem_cap = _vmem_capacity_bytes()
    vmem_budget = vmem_cap // 3
    vmem_limit = vmem_cap // 2        # explicit scoped limit (v5e default: 16 MiB)

    # One-time wrapper-side layout work (not per-grid-step).
    Wt_p = jnp.pad(W.T, ((0, Din_pad - Din), (0, Dout_pad - Dout))).astype(cdt)
    b_p = jnp.pad(b.astype(jnp.float32), (0, Dout_pad - Dout)).reshape(1, Dout_pad)

    # ------------------ fused single-kernel path (small graphs) -------------
    N_pad = _round_up(N, sub)
    per_graph = (2 * (N_pad * N_pad + N_pad * Din_pad) * itemsize
                 + 2 * N_pad * Dout_pad * out_itemsize
                 + N_pad * C_mid_pad * (4 + itemsize))          # f32 interm. + cast
    resident = 2 * Din_pad * Dout_pad * itemsize + 2 * Dout_pad * 4  # W + bias
    if N_pad <= 512 and per_graph + resident <= vmem_budget:
        A_p = jnp.pad(A, ((0, 0), (0, N_pad - N), (0, N_pad - N))).astype(cdt)
        X_p = jnp.pad(X, ((0, 0), (0, N_pad - N), (0, Din_pad - Din))).astype(cdt)

        bb_cap = max(1, (vmem_budget - resident) // per_graph)
        if B >= 2:
            bb_cap = min(bb_cap, B // 2)   # >= 2 parallel steps for v7x megacore
        BB = _largest_divisor_leq(B, bb_cap)

        kernel = functools.partial(fused_gcn_kernel, agg_first=agg_first)
        out_p = pl.pallas_call(
            kernel,
            out_shape=jax.ShapeDtypeStruct((B, N_pad, Dout_pad), out_dtype),
            grid_spec=pltpu.PrefetchScalarGridSpec(
                num_scalar_prefetch=0,
                grid=(B // BB,),
                in_specs=[
                    pl.BlockSpec((BB, N_pad, N_pad), lambda i: (i, 0, 0)),
                    pl.BlockSpec((BB, N_pad, Din_pad), lambda i: (i, 0, 0)),
                    pl.BlockSpec((Din_pad, Dout_pad), lambda i: (0, 0)),  # W resident
                    pl.BlockSpec((1, Dout_pad), lambda i: (0, 0)),        # bias
                ],
                out_specs=pl.BlockSpec((BB, N_pad, Dout_pad), lambda i: (i, 0, 0)),
            ),
            compiler_params=pltpu.CompilerParams(
                dimension_semantics=("parallel",),
                vmem_limit_bytes=vmem_limit,
            ),
        )(A_p, X_p, Wt_p, b_p)
    else:
        # ------------------ two-phase fallback (large graphs) ---------------
        N_pad = _round_up(N, 256)      # 256 row tiles fill the v6e/v7x MXU
        A_p = jnp.pad(A, ((0, 0), (0, N_pad - N), (0, N_pad - N))).astype(cdt)
        X_p = jnp.pad(X, ((0, 0), (0, N_pad - N), (0, Din_pad - Din))).astype(cdt)
        zero_mid = jnp.zeros((1, C_mid_pad), jnp.float32)  # bias only after linear
        if agg_first:
            y = _aggregate_call(A_p, X_p, zero_mid, cdt, vmem_budget, vmem_limit)
            out_p = _linear_call(y, Wt_p, b_p, out_dtype, vmem_limit)
        else:
            h = _linear_call(X_p, Wt_p, zero_mid, cdt, vmem_limit)
            out_p = _aggregate_call(A_p, h, b_p, out_dtype, vmem_budget, vmem_limit)

    # Slice padding back off only when there is any (avoid an extra HBM pass).
    if N_pad == N and Dout_pad == Dout:
        return out_p
    return out_p[:, :N, :Dout]


if __name__ == "__main__":
    # Small shapes consistent with the module's forward.
    B, N, IN_DIM, OUT_DIM = 2, 16, 32, 64

    key = jax.random.PRNGKey(0)
    k_a, k_x, k_w, k_b = jax.random.split(key, 4)

    A = jax.random.normal(k_a, (B, N, N), dtype=jnp.float32)
    X = jax.random.normal(k_x, (B, N, IN_DIM), dtype=jnp.float32)

    # Deterministic nn.Linear-style init: U(-1/sqrt(in_dim), 1/sqrt(in_dim))
    bound = 1.0 / (IN_DIM ** 0.5)
    W = jax.random.uniform(k_w, (OUT_DIM, IN_DIM), jnp.float32, -bound, bound)
    bias = jax.random.uniform(k_b, (OUT_DIM,), jnp.float32, -bound, bound)

    # TODO(synk): nn.Dropout(p=0.3) is stochastic in training mode; this kernel
    # reproduces inference (eval) semantics where dropout is the identity.
    # (Training would need pltpu.prng_seed/prng_random_bits masking of X.)

    ref = jnp.einsum("bnm,bmd->bnd", A, X) @ W.T + bias

    # f32 compute path: strict numerical check against the f32 reference.
    out = gcn_forward(A, X, W, bias)
    jax.block_until_ready(out)
    assert out.shape == (B, N, OUT_DIM)
    assert jnp.allclose(out, ref, atol=1e-4, rtol=1e-4)

    # bf16 compute path (recommended for inference on v6e/v7x): loose check.
    out_bf16 = gcn_forward(A, X, W, bias, compute_dtype=jnp.bfloat16)
    jax.block_until_ready(out_bf16)
    assert out_bf16.shape == (B, N, OUT_DIM)
    assert bool(jnp.all(jnp.isfinite(out_bf16)))
    assert jnp.allclose(out_bf16, ref, atol=0.2, rtol=0.2)

    print("KERNEL_OK")
</pallas_src>

<mosaic_0001>
module attributes {stable_mosaic.version = 11 : i64} {
  func.func @fused_gcn_kernel(%arg0: i32, %arg1: memref<1x16x16xf32, #tpu.memory_space<vmem>>, %arg2: memref<1x16x128xf32, #tpu.memory_space<vmem>>, %arg3: memref<128x128xf32, #tpu.memory_space<vmem>>, %arg4: memref<1x128xf32, #tpu.memory_space<vmem>>, %arg5: memref<1x16x128xf32, #tpu.memory_space<vmem>>) attributes {dimension_semantics = [#tpu.dimension_semantics<parallel>], iteration_bounds = array<i64: 2>, scalar_prefetch = 0 : i64, scratch_operands = 0 : i64, tpu.core_type = #tpu.core_type<tc>, window_params = [{transform_indices = @transform_0, window_bounds = array<i64: 1, 16, 16>}, {transform_indices = @transform_1, window_bounds = array<i64: 1, 16, 128>}, {pipeline_mode = #tpu.pipeline_mode<synchronous>, transform_indices = @transform_2, window_bounds = array<i64: 128, 128>}, {pipeline_mode = #tpu.pipeline_mode<synchronous>, transform_indices = @transform_3, window_bounds = array<i64: 1, 128>}, {transform_indices = @transform_4, window_bounds = array<i64: 1, 16, 128>}]} {
    %c0 = arith.constant 0 : index
    %c0_0 = arith.constant 0 : index
    %c0_1 = arith.constant 0 : index
    %0 = vector.load %arg1[%c0, %c0_0, %c0_1] : memref<1x16x16xf32, #tpu.memory_space<vmem>>, vector<1x16x16xf32>
    %c0_2 = arith.constant 0 : index
    %c0_3 = arith.constant 0 : index
    %c0_4 = arith.constant 0 : index
    %1 = vector.load %arg2[%c0_2, %c0_3, %c0_4] : memref<1x16x128xf32, #tpu.memory_space<vmem>>, vector<1x16x128xf32>
    %c0_5 = arith.constant 0 : index
    %c0_6 = arith.constant 0 : index
    %2 = vector.load %arg3[%c0_5, %c0_6] : memref<128x128xf32, #tpu.memory_space<vmem>>, vector<128x128xf32>
    "tpu.trace_start"() <{level = 10 : i32, message = "bnm,bmd->bnd"}> : () -> ()
    %cst = arith.constant dense<0.000000e+00> : vector<1x16x128xf32>
    %3 = tpu.matmul %0, %1, %cst {dimension_numbers = #tpu.dot_dimension_numbers<[2], [1], [1], [2], [0, 0, 0, 1, 1, 2], [0], [0]>} : vector<1x16x16xf32>, vector<1x16x128xf32>, vector<1x16x128xf32> -> vector<1x16x128xf32>
    "tpu.trace_stop"() : () -> ()
    %4 = vector.shape_cast %3 : vector<1x16x128xf32> to vector<16x128xf32>
    %cst_7 = arith.constant dense<0.000000e+00> : vector<16x128xf32>
    %5 = tpu.matmul %4, %2, %cst_7 {dimension_numbers = #tpu.dot_dimension_numbers<[1], [0], [0], [1], [0, 0, 1, 1], [], []>} : vector<16x128xf32>, vector<128x128xf32>, vector<16x128xf32> -> vector<16x128xf32>
    %6 = vector.shape_cast %5 : vector<16x128xf32> to vector<1x16x128xf32>
    %c0_8 = arith.constant 0 : index
    %c0_9 = arith.constant 0 : index
    %7 = vector.load %arg4[%c0_8, %c0_9] : memref<1x128xf32, #tpu.memory_space<vmem>>, vector<1x128xf32>
    %8 = vector.shape_cast %7 : vector<1x128xf32> to vector<1x1x128xf32>
    %9 = vector.broadcast %8 : vector<1x1x128xf32> to vector<1x16x128xf32>
    %10 = arith.addf %6, %9 : vector<1x16x128xf32>
    %c0_10 = arith.constant 0 : index
    %c0_11 = arith.constant 0 : index
    %c0_12 = arith.constant 0 : index
    %11 = vector.load %arg5[%c0_10, %c0_11, %c0_12] : memref<1x16x128xf32, #tpu.memory_space<vmem>>, vector<1x16x128xf32>
    tpu.vector_store %arg5[%c0_10, %c0_11, %c0_12], %10 {strides = array<i32>} : memref<1x16x128xf32, #tpu.memory_space<vmem>>, vector<1x16x128xf32>,
    return
  }
  func.func @transform_0(%arg0: i32) -> (i32, i32, i32) {
    %c0_i32 = arith.constant 0 : i32
    %c0_i32_0 = arith.constant 0 : i32
    %c0_i32_1 = arith.constant 0 : i32
    return %arg0, %c0_i32, %c0_i32_0 : i32, i32, i32
  }
  func.func @transform_1(%arg0: i32) -> (i32, i32, i32) {
    %c0_i32 = arith.constant 0 : i32
    %c0_i32_0 = arith.constant 0 : i32
    %c0_i32_1 = arith.constant 0 : i32
    return %arg0, %c0_i32, %c0_i32_0 : i32, i32, i32
  }
  func.func @transform_2(%arg0: i32) -> (i32, i32) {
    %c0_i32 = arith.constant 0 : i32
    %c0_i32_0 = arith.constant 0 : i32
    %c0_i32_1 = arith.constant 0 : i32
    return %c0_i32, %c0_i32_0 : i32, i32
  }
  func.func @transform_3(%arg0: i32) -> (i32, i32) {
    %c0_i32 = arith.constant 0 : i32
    %c0_i32_0 = arith.constant 0 : i32
    %c0_i32_1 = arith.constant 0 : i32
    return %c0_i32, %c0_i32_0 : i32, i32
  }
  func.func @transform_4(%arg0: i32) -> (i32, i32, i32) {
    %c0_i32 = arith.constant 0 : i32
    %c0_i32_0 = arith.constant 0 : i32
    %c0_i32_1 = arith.constant 0 : i32
    return %arg0, %c0_i32, %c0_i32_0 : i32, i32, i32
  }
}

</mosaic_0001>

<llo_original>
// kernel: tpu_custom_call.1
$region0: #{tpu_custom_call.1}
  #allocation0 [shape = 'u32[]', space=smem, size = 0x4, offset = 0x4, fixed_abs, tag = 'smem constant byte address 0x4 - core index']
  #allocation1 [shape = 'u32[72,128]{1,0:T(1,128)}', space=vmem, size = 0x9000, scoped, tag = 'internal scratch']
  %s0 = inlined_call_operand.hbm [shape: f32[2,16,16], index: 0, kind: input, shape index: {}]
  %s1 = inlined_call_operand.hbm [shape: f32[2,16,128], index: 1, kind: input, shape index: {}]
  %s2 = inlined_call_operand.hbm [shape: f32[128,128], index: 2, kind: input, shape index: {}]
  %s3 = inlined_call_operand.vmem [shape: f32[1,128], index: 3, kind: input, shape index: {}]
  %s4 = inlined_call_operand.hbm [shape: f32[2,16,128], index: 4, kind: output, shape index: {}]
  %s5 = sld [smem:[#allocation0]]
  $region61: #{tpu_custom_call.1} parent=0
    _
  %s7 = ssub.s32 1, %s5
  %s8 = scalar_select 0, %s7, %s5
  $region1: #{tpu_custom_call.1} parent=0
    #allocation2 [shape = 'u8[16384]{0}', space=vmem, size = 0x4000, scoped, tag = 'input window, operand 0']
    #allocation3 [shape = 's32[2]{0}', space=sflag, size = 0x8, scoped, tag = 'scoped memory for tpu_custom_call.1']
    #allocation4 [shape = 's32[2]{0}', space=sflag, size = 0x8, scoped, tag = 'scoped memory for tpu_custom_call.1']
    #allocation5 [shape = 'u8[16384]{0}', space=vmem, size = 0x4000, scoped, tag = 'input window, operand 1']
    #allocation6 [shape = 's32[2]{0}', space=sflag, size = 0x8, scoped, tag = 'scoped memory for tpu_custom_call.1']
    #allocation7 [shape = 'u8[65536]{0}', space=vmem, size = 0x10000, scoped, tag = 'input window, operand 2, single buffered']
    #allocation8 [shape = 'u8[16384]{0}', space=vmem, size = 0x4000, scoped, tag = 'output window, operand 0']
    %9 = vsyncpa [#allocation3], 0
    %s10 = scalar_lea.sflag [#allocation3], 1
    %11 = vsyncpa %s10, 0
    %12 = vsyncpa [#allocation6], 0
    %s13 = scalar_lea.sflag [#allocation6], 1
    %14 = vsyncpa %s13, 0
    %15 = vsyncpa [#allocation4], 0
    %s16 = scalar_lea.sflag [#allocation4], 1
    %17 = vsyncpa %s16, 0
    loop: start=0, step=1, limit=4
    $region2: #{tpu_custom_call.1} parent=1 // loop_pre_header
      _
    $region3: #{tpu_custom_call.1} parent=1 // loop_header
      %s19 = sphi 0, %s23
      %p20 = scmp.ge.s32.totalorder %s19, 4
      %s29 = sphi 0, %s31
      %s32 = sphi 0, %s29
      %s33 = sphi 0, %s32
      %s49 = sphi 0, %s33
      %s55 = sphi 0, %s57
      %s58 = sphi 0, %s55
      %s59 = sphi 0, %s58
      %s75 = sphi 0, %s59
      %s79 = sphi 0, %s79
      %s81 = sphi 0, %s79
      %s82 = sphi 0, %s81
      %s96 = sphi 0, %s82
      %s100 = sphi 0, %s100
      %s102 = sphi 0, %s100
      %s103 = sphi 0, %s102
      %s117 = sphi 0, %s103
      %s123 = sphi 0, %s125
      %s126 = sphi 0, %s123
      %s127 = sphi 0, %s126
      %s143 = sphi 0, %s127
    $region4: #{tpu_custom_call.1} parent=1 // loop_header_branch
      %22 = sbr.rel (%p20) target = $region8
    $region5: #{tpu_custom_call.1} parent=1 // loop_body
      %s24 = ssub.s32 %s19, 1
      %s25 = ssub.s32 %s19, 2
      %s26 = sadd.s32 %s19, 1
      %s27 = ssub.s32 %s19, %s26
      %p28 = scmp.eq.s32.totalorder %s27, 0
      %s30 = sadd.s32 %s29, 1
      %s31 = scalar_select %p28, %s29, %s30
      %p34 = pneg %p28
      %p35 = scmp.eq.s32.totalorder %s19, 1
      %p36 = por %p34, %p35
      %p37 = scmp.ne.s32.totalorder %s29, %s32
      %p38 = scmp.eq.s32.totalorder %s19, 0
      %p39 = por %p37, %p38
      %p40 = scmp.ne.s32.totalorder %s29, %s32
      %p41 = scmp.eq.s32.totalorder %s24, 1
      %p42 = por %p40, %p41
      %p43 = scmp.ne.s32.totalorder %s32, %s33
      %p44 = scmp.eq.s32.totalorder %s24, 0
      %p45 = por %p43, %p44
      %p46 = scmp.ne.s32.totalorder %s32, %s33
      %p47 = scmp.eq.s32.totalorder %s25, 1
      %p48 = por %p46, %p47
      %p50 = scmp.ne.s32.totalorder %s33, %s49
      %p51 = scmp.eq.s32.totalorder %s25, 0
      %p52 = por %p50, %p51
      %s53 = ssub.s32 %s19, %s26
      %p54 = scmp.eq.s32.totalorder %s53, 0
      %s56 = sadd.s32 %s55, 1
      %s57 = scalar_select %p54, %s55, %s56
      %p60 = pneg %p54
      %p61 = scmp.eq.s32.totalorder %s19, 1
      %p62 = por %p60, %p61
      %p63 = scmp.ne.s32.totalorder %s55, %s58
      %p64 = scmp.eq.s32.totalorder %s19, 0
      %p65 = por %p63, %p64
      %p66 = scmp.ne.s32.totalorder %s55, %s58
      %p67 = scmp.eq.s32.totalorder %s24, 1
      %p68 = por %p66, %p67
      %p69 = scmp.ne.s32.totalorder %s58, %s59
      %p70 = scmp.eq.s32.totalorder %s24, 0
      %p71 = por %p69, %p70
      %p72 = scmp.ne.s32.totalorder %s58, %s59
      %p73 = scmp.eq.s32.totalorder %s25, 1
      %p74 = por %p72, %p73
      %p76 = scmp.ne.s32.totalorder %s59, %s75
      %p77 = scmp.eq.s32.totalorder %s25, 0
      %p78 = por %p76, %p77
      %s80 = sadd.s32 %s79, 1
      %p83 = scmp.eq.s32.totalorder %s19, 1
      %p84 = scmp.ne.s32.totalorder %s79, %s81
      %p85 = scmp.eq.s32.totalorder %s19, 0
      %p86 = por %p84, %p85
      %p87 = scmp.ne.s32.totalorder %s79, %s81
      %p88 = scmp.eq.s32.totalorder %s24, 1
      %p89 = por %p87, %p88
      %p90 = scmp.ne.s32.totalorder %s81, %s82
      %p91 = scmp.eq.s32.totalorder %s24, 0
      %p92 = por %p90, %p91
      %p93 = scmp.ne.s32.totalorder %s81, %s82
      %p94 = scmp.eq.s32.totalorder %s25, 1
      %p95 = por %p93, %p94
      %p97 = scmp.ne.s32.totalorder %s82, %s96
      %p98 = scmp.eq.s32.totalorder %s25, 0
      %p99 = por %p97, %p98
      %s101 = sadd.s32 %s100, 1
      %p104 = scmp.eq.s32.totalorder %s19, 1
      %p105 = scmp.ne.s32.totalorder %s100, %s102
      %p106 = scmp.eq.s32.totalorder %s19, 0
      %p107 = por %p105, %p106
      %p108 = scmp.ne.s32.totalorder %s100, %s102
      %p109 = scmp.eq.s32.totalorder %s24, 1
      %p110 = por %p108, %p109
      %p111 = scmp.ne.s32.totalorder %s102, %s103
      %p112 = scmp.eq.s32.totalorder %s24, 0
      %p113 = por %p111, %p112
      %p114 = scmp.ne.s32.totalorder %s102, %s103
      %p115 = scmp.eq.s32.totalorder %s25, 1
      %p116 = por %p114, %p115
      %p118 = scmp.ne.s32.totalorder %s103, %s117
      %p119 = scmp.eq.s32.totalorder %s25, 0
      %p120 = por %p118, %p119
      %s121 = ssub.s32 %s19, %s26
      %p122 = scmp.eq.s32.totalorder %s121, 0
      %s124 = sadd.s32 %s123, 1
      %s125 = scalar_select %p122, %s123, %s124
      %p128 = pneg %p122
      %p129 = scmp.eq.s32.totalorder %s19, 1
      %p130 = por %p128, %p129
      %p131 = scmp.ne.s32.totalorder %s123, %s126
      %p132 = scmp.eq.s32.totalorder %s19, 0
      %p133 = por %p131, %p132
      %p134 = scmp.ne.s32.totalorder %s123, %s126
      %p135 = scmp.eq.s32.totalorder %s24, 1
      %p136 = por %p134, %p135
      %p137 = scmp.ne.s32.totalorder %s126, %s127
      %p138 = scmp.eq.s32.totalorder %s24, 0
      %p139 = por %p137, %p138
      %p140 = scmp.ne.s32.totalorder %s126, %s127
      %p141 = scmp.eq.s32.totalorder %s25, 1
      %p142 = por %p140, %p141
      %p144 = scmp.ne.s32.totalorder %s127, %s143
      %p145 = scmp.eq.s32.totalorder %s25, 0
      %p146 = por %p144, %p145
      %p147 = scmp.le.s32.totalorder 1, %s19
      %p148 = scmp.lt.s32.totalorder %s19, 3
      %p149 = pnand %p147, %p148
      %p150 = pneg %p149
      // Predicated region
      $region9: #{tpu_custom_call.1} parent=5 // pred_check
        _
      $region10: #{tpu_custom_call.1} parent=5 // pred_check_branch
        %152 = sbr.rel (%p149) target = $region12
      $region11: #{tpu_custom_call.1} parent=5 // pred_region
        %s153 = ssub.s32 %s19, 1
        // Predicated region
        $region13: #{tpu_custom_call.1} parent=11 // pred_check
          %p154 = pneg %p92
        $region14: #{tpu_custom_call.1} parent=11 // pred_check_branch
          %156 = sbr.rel (%p154) target = $region16
        $region15: #{tpu_custom_call.1} parent=11 // pred_region
          %158 = vsyncadd [#allocation6], 0
          %s159 = sshll.u32 %s2, 4
          %s160 = int_to_ptr.hbm [resolvable:$true] %s159
          %s161 = sshll.u32 [#allocation7], 4
          %s162 = int_to_ptr.vmem [resolvable:$true] %s161
          %167 = dma.hbm_to_vmem [thread:$0]  %s160, 2048, %s162, [#allocation6], 128, 128, 8
        $region16: #{tpu_custom_call.1} parent=11 // pred_fallthru
          _
        // Predicated region
        $region17: #{tpu_custom_call.1} parent=11 // pred_check
          %p168 = pneg %p113
        $region18: #{tpu_custom_call.1} parent=11 // pred_check_branch
          %170 = sbr.rel (%p168) target = $region20
        $region19: #{tpu_custom_call.1} parent=11 // pred_region
          _
        $region20: #{tpu_custom_call.1} parent=11 // pred_fallthru
          _
      $region12: #{tpu_custom_call.1} parent=5 // pred_fallthru
        _
      %p171 = scmp.lt.s32.totalorder %s19, 2
      // Predicated region
      $region21: #{tpu_custom_call.1} parent=5 // pred_check
        %p172 = pneg %p171
      $region22: #{tpu_custom_call.1} parent=5 // pred_check_branch
        %174 = sbr.rel (%p172) target = $region24
      $region23: #{tpu_custom_call.1} parent=5 // pred_region
        // Predicated region
        $region25: #{tpu_custom_call.1} parent=23 // pred_check
          %p175 = pneg %p39
        $region26: #{tpu_custom_call.1} parent=23 // pred_check_branch
          %177 = sbr.rel (%p175) target = $region28
        $region27: #{tpu_custom_call.1} parent=23 // pred_region
          %s178 = sand.u32 %s29, 1
          %s179 = scalar_lea.sflag [#allocation3], %s178
          %s180 = sand.u32 %s29, 1
          %s181 = smul.addr %s180, 16
          %s182 = scalar_lea.vmem [#allocation2], %s181
          %184 = vsyncadd %s179, 0
          %s185 = smul.addr %s19, 2
          %s186 = smul.addr %s185, 8
          %s187 = scalar_lea.hbm %s0, %s186
          %s188 = sshll.u32 %s187, 4
          %s189 = int_to_ptr.hbm [resolvable:$true] %s188
          %s190 = sshll.u32 %s182, 4
          %s191 = int_to_ptr.vmem [resolvable:$true] %s190
          %196 = dma.hbm_to_vmem [thread:$0]  %s189, 256, %s191, %s179, 128, 128, 8
        $region28: #{tpu_custom_call.1} parent=23 // pred_fallthru
          _
        // Predicated region
        $region29: #{tpu_custom_call.1} parent=23 // pred_check
          %p197 = pneg %p65
        $region30: #{tpu_custom_call.1} parent=23 // pred_check_branch
          %199 = sbr.rel (%p197) target = $region32
        $region31: #{tpu_custom_call.1} parent=23 // pred_region
          %s200 = sand.u32 %s19, 1
          %s201 = scalar_lea.sflag [#allocation6], %s200
          %s202 = sand.u32 %s55, 1
          %s203 = smul.addr %s202, 16
          %s204 = scalar_lea.vmem [#allocation5], %s203
          %206 = vsyncadd %s201, 0
          %s207 = smul.addr %s19, 2
          %s208 = smul.addr %s207, 8
          %s209 = scalar_lea.hbm %s1, %s208
          %s210 = sshll.u32 %s209, 4
          %s211 = int_to_ptr.hbm [resolvable:$true] %s210
          %s212 = sshll.u32 %s204, 4
          %s213 = int_to_ptr.vmem [resolvable:$true] %s212
          %218 = dma.hbm_to_vmem [thread:$0]  %s211, 256, %s213, %s201, 128, 128, 8
        $region32: #{tpu_custom_call.1} parent=23 // pred_fallthru
          _
      $region24: #{tpu_custom_call.1} parent=5 // pred_fallthru
        _
      %p219 = scmp.le.s32.totalorder 1, %s19
      %p220 = scmp.lt.s32.totalorder %s19, 3
      %p221 = pnand %p219, %p220
      %p222 = pneg %p221
      // Predicated region
      $region33: #{tpu_custom_call.1} parent=5 // pred_check
        _
      $region34: #{tpu_custom_call.1} parent=5 // pred_check_branch
        %224 = sbr.rel (%p221) target = $region36
      $region35: #{tpu_custom_call.1} parent=5 // pred_region
        %s225 = ssub.s32 %s19, 1
        %s226 = sand.u32 %s32, 1
        %s227 = scalar_lea.sflag [#allocation3], %s226
        %s228 = sand.u32 %s32, 1
        %s229 = smul.addr %s228, 16
        %s230 = scalar_lea.vmem [#allocation2], %s229
        // Predicated region
        $region37: #{tpu_custom_call.1} parent=35 // pred_check
          %p231 = pneg %p45
        $region38: #{tpu_custom_call.1} parent=35 // pred_check_branch
          %233 = sbr.rel (%p231) target = $region40
        $region39: #{tpu_custom_call.1} parent=35 // pred_region
          %235 = dma.done %s227, 256
        $region40: #{tpu_custom_call.1} parent=35 // pred_fallthru
          _
        %s236 = sand.u32 %s24, 1
        %s237 = scalar_lea.sflag [#allocation6], %s236
        %s238 = sand.u32 %s58, 1
        %s239 = smul.addr %s238, 16
        %s240 = scalar_lea.vmem [#allocation5], %s239
        // Predicated region
        $region41: #{tpu_custom_call.1} parent=35 // pred_check
          %p241 = pneg %p71
        $region42: #{tpu_custom_call.1} parent=35 // pred_check_branch
          %243 = sbr.rel (%p241) target = $region44
        $region43: #{tpu_custom_call.1} parent=35 // pred_region
          %245 = dma.done %s237, 256
        $region44: #{tpu_custom_call.1} parent=35 // pred_fallthru
          _
        // Predicated region
        $region45: #{tpu_custom_call.1} parent=35 // pred_check
          %p246 = pneg %p92
        $region46: #{tpu_custom_call.1} parent=35 // pred_check_branch
          %248 = sbr.rel (%p246) target = $region48
        $region47: #{tpu_custom_call.1} parent=35 // pred_region
          %250 = dma.done [#allocation6], 2048
        $region48: #{tpu_custom_call.1} parent=35 // pred_fallthru
          _
        %s251 = sand.u32 %s32, 1
        %s252 = scalar_lea.sflag [#allocation3], %s251
        %s253 = sand.u32 %s32, 1
        %s254 = smul.addr %s253, 16
        %s255 = scalar_lea.vmem [#allocation2], %s254
        %p256 = pneg %p45
        %p257 = pneg %p42
        %s258 = sand.u32 %s24, 1
        %s259 = scalar_lea.sflag [#allocation6], %s258
        %s260 = sand.u32 %s58, 1
        %s261 = smul.addr %s260, 16
        %s262 = scalar_lea.vmem [#allocation5], %s261
        %p263 = pneg %p71
        %p264 = pneg %p68
        %p265 = pneg %p92
        %p266 = pneg %p89
        %p267 = pneg %p113
        %p268 = pneg %p110
        %p269 = pneg %p139
        %p270 = pneg %p136
        %s271 = sand.u32 %s126, 1
        %s272 = scalar_lea.sflag [#allocation4], %s271
        %s273 = sand.u32 %s126, 1
        %s274 = smul.addr %s273, 16
        %s275 = scalar_lea.vmem [#allocation8], %s274
        %v276 = vld [vmem:[%s230] sm:$0xff]
        %v277 = vld [vmem:[%s230 + $0x8] sm:$0xff]
        %v278 = vld [vmem:[%s240] sm:$0xff]
        %v279 = vld [vmem:[%s240 + $0x8] sm:$0xff]
        %v280 = vld [vmem:[#allocation7] sm:$0xff]
        %v281 = vld [vmem:[#allocation7 + $0x8] sm:$0xff]
        %v282 = vld [vmem:[#allocation7 + $0x10] sm:$0xff]
        %v283 = vld [vmem:[#allocation7 + $0x18] sm:$0xff]
        %v284 = vld [vmem:[#allocation7 + $0x20] sm:$0xff]
        %v285 = vld [vmem:[#allocation7 + $0x28] sm:$0xff]
        %v286 = vld [vmem:[#allocation7 + $0x30] sm:$0xff]
        %v287 = vld [vmem:[#allocation7 + $0x38] sm:$0xff]
        %v288 = vld [vmem:[#allocation7 + $0x40] sm:$0xff]
        %v289 = vld [vmem:[#allocation7 + $0x48] sm:$0xff]
        %v290 = vld [vmem:[#allocation7 + $0x50] sm:$0xff]
        %v291 = vld [vmem:[#allocation7 + $0x58] sm:$0xff]
        %v292 = vld [vmem:[#allocation7 + $0x60] sm:$0xff]
        %v293 = vld [vmem:[#allocation7 + $0x68] sm:$0xff]
        %v294 = vld [vmem:[#allocation7 + $0x70] sm:$0xff]
        %v295 = vld [vmem:[#allocation7 + $0x78] sm:$0xff]
        %vm296 = vcmask 130048
        %v298 = vsel %vm296, %v276, 0
        %v301 = vsel %vm296, %v277, 0
        %303 = vmatpush.msra.mxu0 0.0
        %304 = vmatpush.msra.mxu0 0.0
        %305 = vmatpush.msra.mxu0 0.0
        %306 = vmatpush.msra.mxu0 0.0
        %307 = vmatpush.msra.mxu0 0.0
        %308 = vmatpush.msra.mxu0 0.0
        %309 = vmatpush.msra.mxu0 0.0
        %310 = vmatpush.msra.mxu0 0.0
        %311 = vmatpush.msra.mxu0 0.0
        %312 = vmatpush.msra.mxu0 0.0
        %313 = vmatpush.msra.mxu0 0.0
        %314 = vmatpush.msra.mxu0 0.0
        %315 = vmatpush.msra.mxu0 0.0
        %316 = vmatpush.msra.mxu0 0.0
        %317 = vmatpush.msra.mxu0 %v279
        %318 = vmatpush.msra.mxu0 %v278
        %319 = vmatmul.f32.gmra.mxu0 %v298
        %v320 = vpop.f32.mrf.mxu0
        %v321 = vadd.f32 0.0, %v320
        %322 = vmatmul.f32.gmra.mxu0 %v301
        %v323 = vpop.f32.mrf.mxu0
        %v324 = vadd.f32 0.0, %v323
        %325 = vdwg.mxu0
        %326 = vmatpush.msra.mxu0 %v295
        %327 = vmatpush.msra.mxu0 %v294
        %328 = vmatpush.msra.mxu0 %v293
        %329 = vmatpush.msra.mxu0 %v292
        %330 = vmatpush.msra.mxu0 %v291
        %331 = vmatpush.msra.mxu0 %v290
        %332 = vmatpush.msra.mxu0 %v289
        %333 = vmatpush.msra.mxu0 %v288
        %334 = vmatpush.msra.mxu0 %v287
        %335 = vmatpush.msra.mxu0 %v286
        %336 = vmatpush.msra.mxu0 %v285
        %337 = vmatpush.msra.mxu0 %v284
        %338 = vmatpush.msra.mxu0 %v283
        %339 = vmatpush.msra.mxu0 %v282
        %340 = vmatpush.msra.mxu0 %v281
        %341 = vmatpush.msra.mxu0 %v280
        %342 = vmatmul.f32.gmra.mxu0 %v321
        %v343 = vpop.f32.mrf.mxu0
        %v344 = vadd.f32 0.0, %v343
        %345 = vmatmul.f32.gmra.mxu0 %v324
        %v346 = vpop.f32.mrf.mxu0
        %v347 = vadd.f32 0.0, %v346
        %348 = vdwg.mxu0
        %v349 = vld [vmem:[%s3] sm:$0x1]
        %v351 = vperm.slane %v349, 0
        %v353 = vadd.f32 %v344, %v351
        %v354 = vadd.f32 %v347, %v351
        %355 = vst [vmem:[%s275] sm:$0xff] %v353
        %356 = vst [vmem:[%s275 + $0x8] sm:$0xff] %v354
        %s357 = sand.u32 %s126, 1
        %s358 = scalar_lea.sflag [#allocation4], %s357
        %s359 = sand.u32 %s126, 1
        %s360 = smul.addr %s359, 16
        %s361 = scalar_lea.vmem [#allocation8], %s360
        // Predicated region
        $region49: #{tpu_custom_call.1} parent=35 // pred_check
          %p362 = pneg %p136
        $region50: #{tpu_custom_call.1} parent=35 // pred_check_branch
          %364 = sbr.rel (%p362) target = $region52
        $region51: #{tpu_custom_call.1} parent=35 // pred_region
          %366 = vsyncadd %s358, 0
          %s367 = smul.addr %s24, 2
          %s368 = smul.addr %s367, 8
          %s369 = scalar_lea.hbm %s4, %s368
          %s370 = sshll.u32 %s361, 4
          %s371 = int_to_ptr.vmem [resolvable:$true] %s370
          %s372 = sshll.u32 %s369, 4
          %s373 = int_to_ptr.hbm [resolvable:$true] %s372
          %378 = dma.vmem_to_hbm [thread:$0]  %s371, 256, %s373, %s358, 128, 128, 8
        $region52: #{tpu_custom_call.1} parent=35 // pred_fallthru
          _
      $region36: #{tpu_custom_call.1} parent=5 // pred_fallthru
        _
      %p379 = scmp.le.s32.totalorder 2, %s19
      // Predicated region
      $region53: #{tpu_custom_call.1} parent=5 // pred_check
        %p380 = pneg %p379
      $region54: #{tpu_custom_call.1} parent=5 // pred_check_branch
        %382 = sbr.rel (%p380) target = $region56
      $region55: #{tpu_custom_call.1} parent=5 // pred_region
        %s383 = ssub.s32 %s19, 2
        // Predicated region
        $region57: #{tpu_custom_call.1} parent=55 // pred_check
          %p384 = pneg %p142
        $region58: #{tpu_custom_call.1} parent=55 // pred_check_branch
          %386 = sbr.rel (%p384) target = $region60
        $region59: #{tpu_custom_call.1} parent=55 // pred_region
          %s387 = sand.u32 %s127, 1
          %s388 = scalar_lea.sflag [#allocation4], %s387
          %s389 = sand.u32 %s127, 1
          %s390 = smul.addr %s389, 16
          %s391 = scalar_lea.vmem [#allocation8], %s390
          %393 = dma.done %s388, 256
        $region60: #{tpu_custom_call.1} parent=55 // pred_fallthru
          _
      $region56: #{tpu_custom_call.1} parent=5 // pred_fallthru
        _
    $region6: #{tpu_custom_call.1} parent=1 // loop_footer
      %s23 = sadd.s32 1, %s19
    $region7: #{tpu_custom_call.1} parent=1 // loop_footer_branch
      %18 = sbr.rel target = $region3
    $region8: #{tpu_custom_call.1} parent=1 // loop_exit
      _
    %394 = vsyncpa [#allocation3], 1
    %s395 = scalar_lea.sflag [#allocation3], 1
    %396 = vsyncpa %s395, 1
    %397 = vsyncpa [#allocation6], 1
    %s398 = scalar_lea.sflag [#allocation6], 1
    %399 = vsyncpa %s398, 1
    %400 = vsyncpa [#allocation4], 1
    %s401 = scalar_lea.sflag [#allocation4], 1
    %402 = vsyncpa %s401, 1

</llo_original>
